<compile_context>
chip_gen: v7x
topology: tpu7x:2x2x1
jax: 0.10.0
libtpu: 0.0.40
codegen_flags: <defaults>
</compile_context>

<pallas_src>
import functools

import jax
import jax.numpy as jnp
from jax.experimental import pallas as pl
from jax.experimental.pallas import tpu as pltpu


def _round_up(x, m):
    return ((x + m - 1) // m) * m


def _cdiv(a, b):
    return (a + b - 1) // b


def _vmem_cap_bytes():
    # Generation-aware usable-VMEM ceiling (1/8 headroom); conservative 56 MiB
    # fallback (safe on v7x's 64 MiB physical) if the query is unavailable.
    try:
        return int(pltpu.get_tpu_info().vmem_capacity_bytes) * 7 // 8
    except Exception:
        return 56 * 1024 * 1024


def decoder_step_kernel(x_ref, h_ref, enc_ref,
                        w_ih_ref, w_hh_ref, b_i_ref, b_hn_ref,
                        w_out_ref, b_out_ref,
                        out_ref, ctx_ref, hid_ref, attn_ref,
                        *, H2, Hg, S_valid, O_valid, approx_recip):
    """One fused decoder step for one (TB,) batch tile.

    H2 = 2*hidden (GRU hidden size); Hg = round_up(H2, 128) (per-gate lane pad).
    Matmul operands are w_ih_ref.dtype (bf16 or f32) with f32 MXU accumulation;
    all elementwise / softmax / logsumexp math stays f32 (v5e has no bf16 VPU/EUP).
    """
    cdt = w_ih_ref.dtype
    S_blk = enc_ref.shape[1]
    O_pad = out_ref.shape[1]

    x = x_ref[...]                                   # (TB, E+2H)      cdt
    h = h_ref[...]                                   # (TB, 2H)        f32
    enc = enc_ref[...]                               # (TB, S_blk, 2H) f32

    # ---- GRU cell (PyTorch gate order r, z, n); two fused (TB, 3*Hg) MXU matmuls.
    #      Each gate occupies Hg lanes so every gate slice is lane-aligned.
    gi = jnp.dot(x, w_ih_ref[...], preferred_element_type=jnp.float32) + b_i_ref[...]
    gh = jnp.dot(h.astype(cdt), w_hh_ref[...], preferred_element_type=jnp.float32)
    r = jax.nn.sigmoid(gi[:, 0 * Hg:0 * Hg + H2] + gh[:, 0 * Hg:0 * Hg + H2])
    z = jax.nn.sigmoid(gi[:, 1 * Hg:1 * Hg + H2] + gh[:, 1 * Hg:1 * Hg + H2])
    n = jnp.tanh(gi[:, 2 * Hg:2 * Hg + H2]
                 + r * (gh[:, 2 * Hg:2 * Hg + H2] + b_hn_ref[...]))
    h_new = (1.0 - z) * n + z * h                    # (TB, 2H) f32 == rnn_output

    # ---- attention ('general'): one query per row -> MXU would run at M=1
    #      (near-zero utilization), so use VPU broadcast-multiply + XLU reduce,
    #      entirely in f32 (no bf16 cast of enc or of the attention weights).
    scores = jnp.sum(h_new[:, None, :] * enc, axis=-1)            # (TB, S_blk) f32
    if S_valid < S_blk:
        kv = jax.lax.broadcasted_iota(jnp.int32, scores.shape, 1)
        scores = jnp.where(kv < S_valid, scores, -1e30)
    m = jnp.max(scores, axis=-1, keepdims=True)
    p = jnp.exp(scores - m)
    denom = jnp.sum(p, axis=-1, keepdims=True)
    if approx_recip:
        attn = p * pl.reciprocal(denom, approx=True)              # EUP slot
    else:
        attn = p / denom                                          # (TB, S_blk) f32

    # ---- context = attn @ encoder_outputs: VPU lane-broadcast mul + sublane reduce.
    context = jnp.sum(attn[:, :, None] * enc, axis=1)             # (TB, 2H) f32

    # ---- output projection: one fused (TB, 4H) x (4H, O_pad) MXU matmul
    #      (double contraction depth vs. two H2-deep halves), then log_softmax.
    proj_in = jnp.concatenate([h_new, context], axis=-1).astype(cdt)
    logits = (jnp.dot(proj_in, w_out_ref[...], preferred_element_type=jnp.float32)
              + b_out_ref[...])                                   # (TB, O_pad) f32
    if O_valid < O_pad:
        oc = jax.lax.broadcasted_iota(jnp.int32, logits.shape, 1)
        logits = jnp.where(oc < O_valid, logits, -1e30)
    lmax = jnp.max(logits, axis=-1, keepdims=True)
    lse = jnp.log(jnp.sum(jnp.exp(logits - lmax), axis=-1, keepdims=True)) + lmax

    out_ref[...] = (logits - lse).astype(out_ref.dtype)
    ctx_ref[...] = context.astype(ctx_ref.dtype)
    hid_ref[...] = h_new.astype(hid_ref.dtype)
    attn_ref[...] = attn.astype(attn_ref.dtype)


def pack_decoder_params(params, compute_dtype=jnp.bfloat16):
    """One-time weight packing: transposes, per-gate lane alignment, gate-bias
    fusion, fused output projection, O lane padding, matmul-operand dtype cast."""
    H2 = params["w_hh"].shape[1]          # GRU hidden size = 2*hidden
    O = params["w_out"].shape[0]
    Hg = _round_up(H2, 128)               # per-gate lane-aligned width (no-op if aligned)
    O_pad = _round_up(O, 128)

    def pack_gates(w_t, dtype):           # (K, 3*H2) -> (K, 3*Hg), zero lane pad
        out = jnp.zeros((w_t.shape[0], 3 * Hg), dtype)
        for g in range(3):
            out = out.at[:, g * Hg:g * Hg + H2].set(
                w_t[:, g * H2:(g + 1) * H2].astype(dtype))
        return out

    w_ih_t = pack_gates(params["w_ih"].T, compute_dtype)      # (E+2H, 3*Hg)
    w_hh_t = pack_gates(params["w_hh"].T, compute_dtype)      # (2H,   3*Hg)

    b_ih, b_hh = params["b_ih"], params["b_hh"]               # (3, 2H) each, r/z/n
    # r/z: b_ih + b_hh pre-summed; n: only b_ih here (b_hh[n] applied inside r*(...)).
    fused = jnp.stack([b_ih[0] + b_hh[0], b_ih[1] + b_hh[1], b_ih[2]])
    b_i = pack_gates(fused.reshape(1, 3 * H2), jnp.float32)   # (1, 3*Hg)
    b_hn = b_hh[2][None, :].astype(jnp.float32)               # (1, 2H)

    w_out_t = jnp.zeros((2 * H2, O_pad), compute_dtype).at[:, :O].set(
        params["w_out"].T.astype(compute_dtype))              # (4H, O_pad) fused
    b_out = jnp.zeros((1, O_pad), jnp.float32).at[0, :O].set(
        params["b_out"][0].astype(jnp.float32))

    return dict(embedding=params["embedding"], w_ih_t=w_ih_t, w_hh_t=w_hh_t,
                b_i=b_i, b_hn=b_hn, w_out_t=w_out_t, b_out=b_out,
                H2=H2, Hg=Hg, O=O, compute_dtype=compute_dtype,
                exact=(compute_dtype == jnp.float32))


def attn_decoder_gru(word_input, last_context, last_hidden, encoder_outputs, packed):
    """word_input: (B,) int32; last_context/last_hidden: (1, B, 2H);
    encoder_outputs: (B, S, 2H) f32.  Returns PyTorch-shaped
    (output (B, O), context (B, 1, 2H), hidden (1, B, 2H), attn_weights (B, 1, S))."""
    cdt = packed["compute_dtype"]
    csz = jnp.dtype(cdt).itemsize
    H2, Hg, O = packed["H2"], packed["Hg"], packed["O"]
    O_pad = packed["w_out_t"].shape[1]
    G = 3 * Hg

    emb = packed["embedding"][word_input]                       # (B, E) f32
    x = jnp.concatenate([emb, last_context[0]], axis=-1)        # (B, E+2H) f32
    h0 = last_hidden[0].astype(jnp.float32)                     # (B, 2H)
    B, S, _ = encoder_outputs.shape
    E = emb.shape[-1]

    # Batch tile: aim for >= 2 grid steps so the "parallel" axis can shard across
    # v7x's two TensorCores; sublane-aligned, capped at 128 rows.
    TB = min(128, max(8, _round_up(_cdiv(B, 2), 8)))
    nb = _cdiv(B, TB)
    B_pad = nb * TB
    S_enc = _round_up(S, 8)          # sublane pad only; enc's lane dim is H2

    # encoder_outputs stays f32 and is NOT copied/padded unless strictly needed
    # (largest input -> avoid an extra HBM pass).  Attention is f32 on the VPU,
    # so no bf16 cast of enc is required either.
    x_p = x.astype(cdt)
    h_p = h0
    enc_p = encoder_outputs.astype(jnp.float32)
    if B_pad > B:
        x_p = jnp.pad(x_p, ((0, B_pad - B), (0, 0)))
        h_p = jnp.pad(h_p, ((0, B_pad - B), (0, 0)))
    if B_pad > B or S_enc > S:
        enc_p = jnp.pad(enc_p, ((0, B_pad - B), (0, S_enc - S), (0, 0)))

    kern = functools.partial(decoder_step_kernel, H2=H2, Hg=Hg, S_valid=S,
                             O_valid=O, approx_recip=not packed["exact"])

    weights = (packed["w_ih_t"], packed["w_hh_t"], packed["b_i"], packed["b_hn"],
               packed["w_out_t"], packed["b_out"])
    kernel_args = (x_p, h_p, enc_p) + weights

    # ---- VMEM budget: single-buffered weights + double-buffered per-tile I/O,
    #      2x headroom for in-kernel intermediates, clamped to generation capacity.
    weight_bytes = sum(int(w.size) * w.dtype.itemsize for w in weights)
    tile_io_bytes = (TB * (E + H2) * csz + TB * H2 * 4 + TB * S_enc * H2 * 4
                     + TB * O_pad * 4 + 2 * TB * H2 * 4 + TB * S_enc * 4)
    vmem_need = weight_bytes + 2 * tile_io_bytes
    vmem_limit = int(min(max(2 * vmem_need + (4 << 20), 32 << 20), _vmem_cap_bytes()))

    flops = 2 * B_pad * ((E + H2) * G + H2 * G + 2 * S_enc * H2 + 2 * H2 * O_pad)
    hbm_bytes = (weight_bytes + B_pad * (E + H2) * csz + B_pad * H2 * 4
                 + B_pad * S_enc * H2 * 4
                 + B_pad * (O_pad + 2 * H2 + S_enc) * 4)
    cost = pl.CostEstimate(flops=flops,
                           transcendentals=B_pad * (3 * H2 + S_enc + O_pad),
                           bytes_accessed=int(hbm_bytes))

    row2 = lambda i: (i, 0)
    const2 = lambda i: (0, 0)

    def wspec(shape):
        # Constant-index resident weights: one buffer is enough (default
        # double-buffering would just waste VMEM for zero benefit).
        return pl.BlockSpec(shape, const2, pipeline_mode=pl.Buffered(1))

    out, ctx, hid, attn = pl.pallas_call(
        kern,
        grid=(nb,),
        in_specs=[
            pl.BlockSpec((TB, E + H2), row2),                    # x = [emb, last_ctx]
            pl.BlockSpec((TB, H2), row2),                        # h0
            pl.BlockSpec((TB, S_enc, H2), lambda i: (i, 0, 0)),  # encoder_outputs (f32)
            wspec((E + H2, G)),                                  # w_ih_t  (resident)
            wspec((H2, G)),                                      # w_hh_t  (resident)
            wspec((1, G)),                                       # fused input biases
            wspec((1, H2)),                                      # b_hn
            wspec((2 * H2, O_pad)),                              # fused w_out
            wspec((1, O_pad)),                                   # b_out
        ],
        out_specs=(
            pl.BlockSpec((TB, O_pad), row2),                     # log-probs (lane-dense)
            pl.BlockSpec((TB, H2), row2),                        # context
            pl.BlockSpec((TB, H2), row2),                        # hidden
            pl.BlockSpec((TB, S_enc), row2),                     # attn weights
        ),
        out_shape=(
            jax.ShapeDtypeStruct((B_pad, O_pad), jnp.float32),
            jax.ShapeDtypeStruct((B_pad, H2), jnp.float32),
            jax.ShapeDtypeStruct((B_pad, H2), jnp.float32),
            jax.ShapeDtypeStruct((B_pad, S_enc), jnp.float32),
        ),
        compiler_params=pltpu.CompilerParams(
            dimension_semantics=("parallel",),
            vmem_limit_bytes=vmem_limit),
        cost_estimate=cost,
    )(*kernel_args)

    return (out[:B, :O],                      # (B, O)      log-probs
            ctx[:B][:, None, :],              # (B, 1, 2H)  context
            hid[:B][None, :, :],              # (1, B, 2H)  new hidden
            attn[:B, :S][:, None, :])         # (B, 1, S)   attention weights


def reference_jax(word_input, last_context, last_hidden, encoder_outputs, params):
    """Pure-JAX f32 reference matching the PyTorch forward."""
    H2 = params["w_hh"].shape[1]
    embed = params["embedding"][word_input]
    x = jnp.concatenate([embed, last_context[0]], axis=-1)
    h = last_hidden[0]
    gi = x @ params["w_ih"].T + params["b_ih"].reshape(-1)
    gh = h @ params["w_hh"].T + params["b_hh"].reshape(-1)
    r = jax.nn.sigmoid(gi[:, :H2] + gh[:, :H2])
    z = jax.nn.sigmoid(gi[:, H2:2 * H2] + gh[:, H2:2 * H2])
    n = jnp.tanh(gi[:, 2 * H2:] + r * gh[:, 2 * H2:])
    h_new = (1 - z) * n + z * h
    scores = jnp.einsum("bd,bsd->bs", h_new, encoder_outputs)
    attn = jax.nn.softmax(scores, axis=-1)
    context = jnp.einsum("bs,bsd->bd", attn, encoder_outputs)
    logits = jnp.concatenate([h_new, context], -1) @ params["w_out"].T + params["b_out"][0]
    out = jax.nn.log_softmax(logits, axis=-1)
    return out, context, h_new, attn


if __name__ == "__main__":
    # small shapes
    B, hidden, E, S, O, vocab = 8, 16, 16, 8, 32, 50
    H2 = 2 * hidden

    key = jax.random.PRNGKey(0)
    ks = jax.random.split(key, 11)
    scale = 0.1
    params = {
        "embedding": jax.random.normal(ks[0], (vocab, E), jnp.float32) * scale,
        "w_ih": jax.random.normal(ks[1], (3 * H2, E + H2), jnp.float32) * scale,
        "w_hh": jax.random.normal(ks[2], (3 * H2, H2), jnp.float32) * scale,
        "b_ih": jax.random.normal(ks[3], (3, H2), jnp.float32) * scale,
        "b_hh": jax.random.normal(ks[4], (3, H2), jnp.float32) * scale,
        "w_out": jax.random.normal(ks[5], (O, 2 * H2), jnp.float32) * scale,
        "b_out": jax.random.normal(ks[6], (1, O), jnp.float32) * scale,
    }
    word_input = jax.random.randint(ks[7], (B,), 0, vocab, jnp.int32)
    last_context = jax.random.normal(ks[8], (1, B, H2), jnp.float32)
    last_hidden = jax.random.normal(ks[9], (1, B, H2), jnp.float32)
    encoder_outputs = jax.random.normal(ks[10], (B, S, H2), jnp.float32)

    ro, rc, rh, ra = reference_jax(word_input, last_context, last_hidden,
                                   encoder_outputs, params)

    # --- optimized path: bf16 MXU operands, f32 accumulation & elementwise ---
    packed_bf16 = pack_decoder_params(params, compute_dtype=jnp.bfloat16)
    out, ctx, hid, attn = attn_decoder_gru(word_input, last_context, last_hidden,
                                           encoder_outputs, packed_bf16)
    jax.block_until_ready((out, ctx, hid, attn))
    assert out.shape == (B, O) and ctx.shape == (B, 1, H2)
    assert hid.shape == (1, B, H2) and attn.shape == (B, 1, S)
    # bf16 matmul operands + approx reciprocal -> loose tolerances vs f32 reference
    assert jnp.allclose(out, ro, atol=1e-1), "bf16 output mismatch"
    assert jnp.allclose(ctx[:, 0, :], rc, atol=1e-1), "bf16 context mismatch"
    assert jnp.allclose(hid[0], rh, atol=5e-2), "bf16 hidden mismatch"
    assert jnp.allclose(attn[:, 0, :], ra, atol=5e-2), "bf16 attn mismatch"

    # --- f32-operand path (exact softmax divide). Tolerances stay conservative
    #     because f32 MXU matmuls may be emulated in reduced-precision passes
    #     depending on TPU generation / compiler defaults. ---
    packed_f32 = pack_decoder_params(params, compute_dtype=jnp.float32)
    out32, ctx32, hid32, attn32 = attn_decoder_gru(
        word_input, last_context, last_hidden, encoder_outputs, packed_f32)
    jax.block_until_ready((out32, ctx32, hid32, attn32))
    assert jnp.allclose(out32, ro, atol=1e-1), "f32 output mismatch"
    assert jnp.allclose(ctx32[:, 0, :], rc, atol=1e-1), "f32 context mismatch"
    assert jnp.allclose(hid32[0], rh, atol=5e-2), "f32 hidden mismatch"
    assert jnp.allclose(attn32[:, 0, :], ra, atol=5e-2), "f32 attn mismatch"

    print("KERNEL_OK")
</pallas_src>

<mosaic_0001>
module attributes {stable_mosaic.version = 11 : i64} {
  func.func @decoder_step_kernel(%arg0: i32, %arg1: memref<8x48xbf16, #tpu.memory_space<vmem>>, %arg2: memref<8x32xf32, #tpu.memory_space<vmem>>, %arg3: memref<8x8x32xf32, #tpu.memory_space<vmem>>, %arg4: memref<48x384xbf16, #tpu.memory_space<vmem>>, %arg5: memref<32x384xbf16, #tpu.memory_space<vmem>>, %arg6: memref<1x384xf32, #tpu.memory_space<vmem>>, %arg7: memref<1x32xf32, #tpu.memory_space<vmem>>, %arg8: memref<64x128xbf16, #tpu.memory_space<vmem>>, %arg9: memref<1x128xf32, #tpu.memory_space<vmem>>, %arg10: memref<8x128xf32, #tpu.memory_space<vmem>>, %arg11: memref<8x32xf32, #tpu.memory_space<vmem>>, %arg12: memref<8x32xf32, #tpu.memory_space<vmem>>, %arg13: memref<8x8xf32, #tpu.memory_space<vmem>>) attributes {dimension_semantics = [#tpu.dimension_semantics<parallel>], iteration_bounds = array<i64: 1>, scalar_prefetch = 0 : i64, scratch_operands = 0 : i64, tpu.core_type = #tpu.core_type<tc>, window_params = [{transform_indices = @transform_0, window_bounds = array<i64: 8, 48>}, {transform_indices = @transform_1, window_bounds = array<i64: 8, 32>}, {transform_indices = @transform_2, window_bounds = array<i64: 8, 8, 32>}, {pipeline_mode = #tpu.pipeline_mode<synchronous>, transform_indices = @transform_3, window_bounds = array<i64: 48, 384>}, {pipeline_mode = #tpu.pipeline_mode<synchronous>, transform_indices = @transform_4, window_bounds = array<i64: 32, 384>}, {pipeline_mode = #tpu.pipeline_mode<synchronous>, transform_indices = @transform_5, window_bounds = array<i64: 1, 384>}, {pipeline_mode = #tpu.pipeline_mode<synchronous>, transform_indices = @transform_6, window_bounds = array<i64: 1, 32>}, {pipeline_mode = #tpu.pipeline_mode<synchronous>, transform_indices = @transform_7, window_bounds = array<i64: 64, 128>}, {pipeline_mode = #tpu.pipeline_mode<synchronous>, transform_indices = @transform_8, window_bounds = array<i64: 1, 128>}, {transform_indices = @transform_9, window_bounds = array<i64: 8, 128>}, {transform_indices = @transform_10, window_bounds = array<i64: 8, 32>}, {transform_indices = @transform_11, window_bounds = array<i64: 8, 32>}, {transform_indices = @transform_12, window_bounds = array<i64: 8, 8>}]} {
    %c0 = arith.constant 0 : index
    %c0_0 = arith.constant 0 : index
    %0 = vector.load %arg1[%c0, %c0_0] : memref<8x48xbf16, #tpu.memory_space<vmem>>, vector<8x48xbf16>
    %c0_1 = arith.constant 0 : index
    %c0_2 = arith.constant 0 : index
    %1 = vector.load %arg2[%c0_1, %c0_2] : memref<8x32xf32, #tpu.memory_space<vmem>>, vector<8x32xf32>
    %c0_3 = arith.constant 0 : index
    %c0_4 = arith.constant 0 : index
    %c0_5 = arith.constant 0 : index
    %2 = vector.load %arg3[%c0_3, %c0_4, %c0_5] : memref<8x8x32xf32, #tpu.memory_space<vmem>>, vector<8x8x32xf32>
    %c0_6 = arith.constant 0 : index
    %c0_7 = arith.constant 0 : index
    %3 = vector.load %arg4[%c0_6, %c0_7] : memref<48x384xbf16, #tpu.memory_space<vmem>>, vector<48x384xbf16>
    %cst = arith.constant dense<0.000000e+00> : vector<8x384xf32>
    %4 = tpu.matmul %0, %3, %cst {dimension_numbers = #tpu.dot_dimension_numbers<[1], [0], [0], [1], [0, 0, 1, 1], [], []>} : vector<8x48xbf16>, vector<48x384xbf16>, vector<8x384xf32> -> vector<8x384xf32>
    %c0_8 = arith.constant 0 : index
    %c0_9 = arith.constant 0 : index
    %5 = vector.load %arg6[%c0_8, %c0_9] : memref<1x384xf32, #tpu.memory_space<vmem>>, vector<1x384xf32>
    %6 = vector.broadcast %5 : vector<1x384xf32> to vector<8x384xf32>
    %7 = arith.addf %4, %6 : vector<8x384xf32>
    %8 = arith.truncf %1 : vector<8x32xf32> to vector<8x32xbf16>
    %c0_10 = arith.constant 0 : index
    %c0_11 = arith.constant 0 : index
    %9 = vector.load %arg5[%c0_10, %c0_11] : memref<32x384xbf16, #tpu.memory_space<vmem>>, vector<32x384xbf16>
    %cst_12 = arith.constant dense<0.000000e+00> : vector<8x384xf32>
    %10 = tpu.matmul %8, %9, %cst_12 {dimension_numbers = #tpu.dot_dimension_numbers<[1], [0], [0], [1], [0, 0, 1, 1], [], []>} : vector<8x32xbf16>, vector<32x384xbf16>, vector<8x384xf32> -> vector<8x384xf32>
    %11 = vector.extract_strided_slice %7 {offsets = [0, 0], sizes = [8, 32], strides = [1, 1]} : vector<8x384xf32> to vector<8x32xf32>
    %12 = vector.extract_strided_slice %10 {offsets = [0, 0], sizes = [8, 32], strides = [1, 1]} : vector<8x384xf32> to vector<8x32xf32>
    %13 = arith.addf %11, %12 : vector<8x32xf32>
    %14 = arith.negf %13 : vector<8x32xf32>
    %15 = math.exp %14 : vector<8x32xf32>
    %cst_13 = arith.constant 1.000000e+00 : f32
    %16 = vector.broadcast %cst_13 : f32 to vector<8x32xf32>
    %17 = arith.addf %16, %15 : vector<8x32xf32>
    %18 = arith.divf %16, %17 : vector<8x32xf32>
    %19 = vector.extract_strided_slice %7 {offsets = [0, 128], sizes = [8, 32], strides = [1, 1]} : vector<8x384xf32> to vector<8x32xf32>
    %20 = vector.extract_strided_slice %10 {offsets = [0, 128], sizes = [8, 32], strides = [1, 1]} : vector<8x384xf32> to vector<8x32xf32>
    %21 = arith.addf %19, %20 : vector<8x32xf32>
    %22 = arith.negf %21 : vector<8x32xf32>
    %23 = math.exp %22 : vector<8x32xf32>
    %cst_14 = arith.constant 1.000000e+00 : f32
    %24 = vector.broadcast %cst_14 : f32 to vector<8x32xf32>
    %25 = arith.addf %24, %23 : vector<8x32xf32>
    %26 = arith.divf %24, %25 : vector<8x32xf32>
    %27 = vector.extract_strided_slice %7 {offsets = [0, 256], sizes = [8, 32], strides = [1, 1]} : vector<8x384xf32> to vector<8x32xf32>
    %28 = vector.extract_strided_slice %10 {offsets = [0, 256], sizes = [8, 32], strides = [1, 1]} : vector<8x384xf32> to vector<8x32xf32>
    %c0_15 = arith.constant 0 : index
    %c0_16 = arith.constant 0 : index
    %29 = vector.load %arg7[%c0_15, %c0_16] : memref<1x32xf32, #tpu.memory_space<vmem>>, vector<1x32xf32>
    %30 = vector.broadcast %29 : vector<1x32xf32> to vector<8x32xf32>
    %31 = arith.addf %28, %30 : vector<8x32xf32>
    %32 = arith.mulf %18, %31 : vector<8x32xf32>
    %33 = arith.addf %27, %32 : vector<8x32xf32>
    %34 = math.tanh %33 : vector<8x32xf32>
    %cst_17 = arith.constant 1.000000e+00 : f32
    %35 = vector.broadcast %cst_17 : f32 to vector<8x32xf32>
    %36 = arith.subf %35, %26 : vector<8x32xf32>
    %37 = arith.mulf %36, %34 : vector<8x32xf32>
    %38 = arith.mulf %26, %1 : vector<8x32xf32>
    %39 = arith.addf %37, %38 : vector<8x32xf32>
    %40 = vector.shape_cast %39 : vector<8x32xf32> to vector<8x1x32xf32>
    %41 = vector.broadcast %40 : vector<8x1x32xf32> to vector<8x8x32xf32>
    %42 = arith.mulf %41, %2 : vector<8x8x32xf32>
    %cst_18 = arith.constant dense<0.000000e+00> : vector<8x8xf32>
    %43 = vector.multi_reduction <add>, %42, %cst_18 [2] : vector<8x8x32xf32> to vector<8x8xf32>
    %cst_19 = arith.constant dense<0xFF800000> : vector<8xf32>
    %44 = vector.multi_reduction <maximumf>, %43, %cst_19 [1] : vector<8x8xf32> to vector<8xf32>
    %45 = vector.shape_cast %44 : vector<8xf32> to vector<8x1xf32>
    %46 = vector.broadcast %45 : vector<8x1xf32> to vector<8x8xf32>
    %47 = arith.subf %43, %46 : vector<8x8xf32>
    %48 = math.exp %47 : vector<8x8xf32>
    %cst_20 = arith.constant dense<0.000000e+00> : vector<8xf32>
    %49 = vector.multi_reduction <add>, %48, %cst_20 [1] : vector<8x8xf32> to vector<8xf32>
    %50 = vector.shape_cast %49 : vector<8xf32> to vector<8x1xf32>
    %51 = tpu.reciprocal %50 {approx = true} : vector<8x1xf32> -> vector<8x1xf32>
    %52 = vector.broadcast %51 : vector<8x1xf32> to vector<8x8xf32>
    %53 = arith.mulf %48, %52 : vector<8x8xf32>
    %54 = vector.shape_cast %53 : vector<8x8xf32> to vector<8x8x1xf32>
    %55 = vector.broadcast %54 : vector<8x8x1xf32> to vector<8x8x32xf32>
    %56 = arith.mulf %55, %2 : vector<8x8x32xf32>
    %cst_21 = arith.constant dense<0.000000e+00> : vector<8x32xf32>
    %57 = vector.multi_reduction <add>, %56, %cst_21 [1] : vector<8x8x32xf32> to vector<8x32xf32>
    %58 = tpu.concatenate %39, %57 in 1 : vector<8x32xf32>, vector<8x32xf32> -> vector<8x64xf32>
    %59 = arith.truncf %58 : vector<8x64xf32> to vector<8x64xbf16>
    %c0_22 = arith.constant 0 : index
    %c0_23 = arith.constant 0 : index
    %60 = vector.load %arg8[%c0_22, %c0_23] : memref<64x128xbf16, #tpu.memory_space<vmem>>, vector<64x128xbf16>
    %cst_24 = arith.constant dense<0.000000e+00> : vector<8x128xf32>
    %61 = tpu.matmul %59, %60, %cst_24 {dimension_numbers = #tpu.dot_dimension_numbers<[1], [0], [0], [1], [0, 0, 1, 1], [], []>} : vector<8x64xbf16>, vector<64x128xbf16>, vector<8x128xf32> -> vector<8x128xf32>
    %c0_25 = arith.constant 0 : index
    %c0_26 = arith.constant 0 : index
    %62 = vector.load %arg9[%c0_25, %c0_26] : memref<1x128xf32, #tpu.memory_space<vmem>>, vector<1x128xf32>
    %63 = vector.broadcast %62 : vector<1x128xf32> to vector<8x128xf32>
    %64 = arith.addf %61, %63 : vector<8x128xf32>
    %65 = tpu.iota {dimensions = array<i32: 1>} : vector<8x128xi32>
    %c32_i32 = arith.constant 32 : i32
    %66 = vector.broadcast %c32_i32 : i32 to vector<8x128xi32>
    %67 = arith.cmpi slt, %65, %66 : vector<8x128xi32>
    %cst_27 = arith.constant -1.000000e+30 : f32
    %68 = vector.broadcast %cst_27 : f32 to vector<8x128xf32>
    %69 = arith.select %67, %64, %68 : vector<8x128xi1>, vector<8x128xf32>
    %cst_28 = arith.constant dense<0xFF800000> : vector<8xf32>
    %70 = vector.multi_reduction <maximumf>, %69, %cst_28 [1] : vector<8x128xf32> to vector<8xf32>
    %71 = vector.shape_cast %70 : vector<8xf32> to vector<8x1xf32>
    %72 = vector.broadcast %71 : vector<8x1xf32> to vector<8x128xf32>
    %73 = arith.subf %69, %72 : vector<8x128xf32>
    %74 = math.exp %73 : vector<8x128xf32>
    %cst_29 = arith.constant dense<0.000000e+00> : vector<8xf32>
    %75 = vector.multi_reduction <add>, %74, %cst_29 [1] : vector<8x128xf32> to vector<8xf32>
    %76 = vector.shape_cast %75 : vector<8xf32> to vector<8x1xf32>
    %77 = math.log %76 : vector<8x1xf32>
    %78 = arith.addf %77, %71 : vector<8x1xf32>
    %79 = vector.broadcast %78 : vector<8x1xf32> to vector<8x128xf32>
    %80 = arith.subf %69, %79 : vector<8x128xf32>
    %c0_30 = arith.constant 0 : index
    %c0_31 = arith.constant 0 : index
    %81 = vector.load %arg10[%c0_30, %c0_31] : memref<8x128xf32, #tpu.memory_space<vmem>>, vector<8x128xf32>
    tpu.vector_store %arg10[%c0_30, %c0_31], %80 {strides = array<i32>} : memref<8x128xf32, #tpu.memory_space<vmem>>, vector<8x128xf32>,
    %c0_32 = arith.constant 0 : index
    %c0_33 = arith.constant 0 : index
    %82 = vector.load %arg11[%c0_32, %c0_33] : memref<8x32xf32, #tpu.memory_space<vmem>>, vector<8x32xf32>
    tpu.vector_store %arg11[%c0_32, %c0_33], %57 {strides = array<i32>} : memref<8x32xf32, #tpu.memory_space<vmem>>, vector<8x32xf32>,
    %c0_34 = arith.constant 0 : index
    %c0_35 = arith.constant 0 : index
    %83 = vector.load %arg12[%c0_34, %c0_35] : memref<8x32xf32, #tpu.memory_space<vmem>>, vector<8x32xf32>
    tpu.vector_store %arg12[%c0_34, %c0_35], %39 {strides = array<i32>} : memref<8x32xf32, #tpu.memory_space<vmem>>, vector<8x32xf32>,
    %c0_36 = arith.constant 0 : index
    %c0_37 = arith.constant 0 : index
    %84 = vector.load %arg13[%c0_36, %c0_37] : memref<8x8xf32, #tpu.memory_space<vmem>>, vector<8x8xf32>
    tpu.vector_store %arg13[%c0_36, %c0_37], %53 {strides = array<i32>} : memref<8x8xf32, #tpu.memory_space<vmem>>, vector<8x8xf32>,
    return
  }
  func.func @transform_0(%arg0: i32) -> (i32, i32) {
    %c0_i32 = arith.constant 0 : i32
    %c0_i32_0 = arith.constant 0 : i32
    return %arg0, %c0_i32 : i32, i32
  }
  func.func @transform_1(%arg0: i32) -> (i32, i32) {
    %c0_i32 = arith.constant 0 : i32
    %c0_i32_0 = arith.constant 0 : i32
    return %arg0, %c0_i32 : i32, i32
  }
  func.func @transform_2(%arg0: i32) -> (i32, i32, i32) {
    %c0_i32 = arith.constant 0 : i32
    %c0_i32_0 = arith.constant 0 : i32
    %c0_i32_1 = arith.constant 0 : i32
    return %arg0, %c0_i32, %c0_i32_0 : i32, i32, i32
  }
  func.func @transform_3(%arg0: i32) -> (i32, i32) {
    %c0_i32 = arith.constant 0 : i32
    %c0_i32_0 = arith.constant 0 : i32
    %c0_i32_1 = arith.constant 0 : i32
    return %c0_i32, %c0_i32_0 : i32, i32
  }
  func.func @transform_4(%arg0: i32) -> (i32, i32) {
    %c0_i32 = arith.constant 0 : i32
    %c0_i32_0 = arith.constant 0 : i32
    %c0_i32_1 = arith.constant 0 : i32
    return %c0_i32, %c0_i32_0 : i32, i32
  }
  func.func @transform_5(%arg0: i32) -> (i32, i32) {
    %c0_i32 = arith.constant 0 : i32
    %c0_i32_0 = arith.constant 0 : i32
    %c0_i32_1 = arith.constant 0 : i32
    return %c0_i32, %c0_i32_0 : i32, i32
  }
  func.func @transform_6(%arg0: i32) -> (i32, i32) {
    %c0_i32 = arith.constant 0 : i32
    %c0_i32_0 = arith.constant 0 : i32
    %c0_i32_1 = arith.constant 0 : i32
    return %c0_i32, %c0_i32_0 : i32, i32
  }
  func.func @transform_7(%arg0: i32) -> (i32, i32) {
    %c0_i32 = arith.constant 0 : i32
    %c0_i32_0 = arith.constant 0 : i32
    %c0_i32_1 = arith.constant 0 : i32
    return %c0_i32, %c0_i32_0 : i32, i32
  }
  func.func @transform_8(%arg0: i32) -> (i32, i32) {
    %c0_i32 = arith.constant 0 : i32
    %c0_i32_0 = arith.constant 0 : i32
    %c0_i32_1 = arith.constant 0 : i32
    return %c0_i32, %c0_i32_0 : i32, i32
  }
  func.func @transform_9(%arg0: i32) -> (i32, i32) {
    %c0_i32 = arith.constant 0 : i32
    %c0_i32_0 = arith.constant 0 : i32
    return %arg0, %c0_i32 : i32, i32
  }
  func.func @transform_10(%arg0: i32) -> (i32, i32) {
    %c0_i32 = arith.constant 0 : i32
    %c0_i32_0 = arith.constant 0 : i32
    return %arg0, %c0_i32 : i32, i32
  }
  func.func @transform_11(%arg0: i32) -> (i32, i32) {
    %c0_i32 = arith.constant 0 : i32
    %c0_i32_0 = arith.constant 0 : i32
    return %arg0, %c0_i32 : i32, i32
  }
  func.func @transform_12(%arg0: i32) -> (i32, i32) {
    %c0_i32 = arith.constant 0 : i32
    %c0_i32_0 = arith.constant 0 : i32
    return %arg0, %c0_i32 : i32, i32
  }
}

</mosaic_0001>

<llo_original>
// kernel: tpu_custom_call.1
$region0: #{tpu_custom_call.1}
  #allocation0 [shape = 'u32[]', space=smem, size = 0x4, offset = 0x4, fixed_abs, tag = 'smem constant byte address 0x4 - core index']
  #allocation1 [shape = 'u32[144,128]{1,0:T(1,128)}', space=vmem, size = 0x12000, scoped, tag = 'internal scratch']
  %s0 = inlined_call_operand.hbm [shape: bf16[8,48], index: 0, kind: input, shape index: {}]
  %s1 = inlined_call_operand.hbm [shape: f32[8,32], index: 1, kind: input, shape index: {}]
  %s2 = inlined_call_operand.hbm [shape: f32[8,8,32], index: 2, kind: input, shape index: {}]
  %s3 = inlined_call_operand.hbm [shape: bf16[48,384], index: 3, kind: input, shape index: {}]
  %s4 = inlined_call_operand.hbm [shape: bf16[32,384], index: 4, kind: input, shape index: {}]
  %s5 = inlined_call_operand.vmem [shape: f32[1,384], index: 5, kind: input, shape index: {}]
  %s6 = inlined_call_operand.vmem [shape: f32[1,32], index: 6, kind: input, shape index: {}]
  %s7 = inlined_call_operand.hbm [shape: bf16[64,128], index: 7, kind: input, shape index: {}]
  %s8 = inlined_call_operand.vmem [shape: f32[1,128], index: 8, kind: input, shape index: {}]
  %s9 = inlined_call_operand.hbm [shape: f32[8,128], index: 9, kind: output, shape index: {0}]
  %s10 = inlined_call_operand.hbm [shape: f32[8,32], index: 10, kind: output, shape index: {1}]
  %s11 = inlined_call_operand.hbm [shape: f32[8,32], index: 11, kind: output, shape index: {2}]
  %s12 = inlined_call_operand.hbm [shape: f32[8,8], index: 12, kind: output, shape index: {3}]
  %13 = xla_tuple %s9, %s10, %s11, %s12
  %s14 = sld [smem:[#allocation0]]
  $region94: #{tpu_custom_call.1} parent=0
    _
  %s16 = ssub.s32 1, %s14
  %s17 = scalar_select 0, %s16, %s14
  $region1: #{tpu_custom_call.1} parent=0
    #allocation2 [shape = 'u8[2048]{0}', space=vmem, size = 0x800, scoped, tag = 'input window, operand 0, single buffered']
    #allocation3 [shape = 's32[1]{0}', space=sflag, size = 0x4, scoped, tag = 'scoped memory for tpu_custom_call.1']
    #allocation4 [shape = 's32[1]{0}', space=sflag, size = 0x4, scoped, tag = 'scoped memory for tpu_custom_call.1']
    #allocation5 [shape = 'u8[4096]{0}', space=vmem, size = 0x1000, scoped, tag = 'input window, operand 1, single buffered']
    #allocation6 [shape = 's32[1]{0}', space=sflag, size = 0x4, scoped, tag = 'scoped memory for tpu_custom_call.1']
    #allocation7 [shape = 'u8[32768]{0}', space=vmem, size = 0x8000, scoped, tag = 'input window, operand 2, single buffered']
    #allocation8 [shape = 'u8[36864]{0}', space=vmem, size = 0x9000, scoped, tag = 'input window, operand 3, single buffered']
    #allocation9 [shape = 's32[1]{0}', space=sflag, size = 0x4, scoped, tag = 'scoped memory for tpu_custom_call.1']
    #allocation10 [shape = 'u8[24576]{0}', space=vmem, size = 0x6000, scoped, tag = 'input window, operand 4, single buffered']
    #allocation11 [shape = 'u8[16384]{0}', space=vmem, size = 0x4000, scoped, tag = 'input window, operand 7, single buffered']
    #allocation12 [shape = 's32[1]{0}', space=sflag, size = 0x4, scoped, tag = 'scoped memory for tpu_custom_call.1']
    #allocation13 [shape = 'u8[4096]{0}', space=vmem, size = 0x1000, scoped, tag = 'output window, operand 0, single buffered']
    #allocation14 [shape = 'u8[4096]{0}', space=vmem, size = 0x1000, scoped, tag = 'output window, operand 1, single buffered']
    #allocation15 [shape = 's32[1]{0}', space=sflag, size = 0x4, scoped, tag = 'scoped memory for tpu_custom_call.1']
    #allocation16 [shape = 'u8[4096]{0}', space=vmem, size = 0x1000, scoped, tag = 'output window, operand 2, single buffered']
    #allocation17 [shape = 'u8[4096]{0}', space=vmem, size = 0x1000, scoped, tag = 'output window, operand 3, single buffered']
    #allocation18 [shape = 's32[1]{0}', space=sflag, size = 0x4, scoped, tag = 'scoped memory for tpu_custom_call.1']
    %18 = vsyncpa [#allocation3], 0
    %19 = vsyncpa [#allocation6], 0
    %20 = vsyncpa [#allocation9], 0
    %21 = vsyncpa [#allocation12], 0
    %22 = vsyncpa [#allocation4], 0
    %23 = vsyncpa [#allocation15], 0
    %24 = vsyncpa [#allocation18], 0
    // Predicated region
    $region2: #{tpu_custom_call.1} parent=1 // pred_check
      _
    $region3: #{tpu_custom_call.1} parent=1 // pred_check_branch
      %26 = sbr.rel (0) target = $region5
    $region4: #{tpu_custom_call.1} parent=1 // pred_region
      %s28 = ssub.s32 64, 64
      %29 = vsyncadd [#allocation3], %s28
      %s31 = sshll.u32 [#allocation2], 4
      %s32 = int_to_ptr.vmem [resolvable:$true] %s31
      %34 = dma.hbm_to_vmem [thread:$0]  %s0, 64, %s32, [#allocation3]
    $region5: #{tpu_custom_call.1} parent=1 // pred_fallthru
      _
    // Predicated region
    $region6: #{tpu_custom_call.1} parent=1 // pred_check
      _
    $region7: #{tpu_custom_call.1} parent=1 // pred_check_branch
      %36 = sbr.rel (0) target = $region9
    $region8: #{tpu_custom_call.1} parent=1 // pred_region
      %s38 = ssub.s32 128, 128
      %39 = vsyncadd [#allocation6], %s38
      %s41 = sshll.u32 [#allocation5], 4
      %s42 = int_to_ptr.vmem [resolvable:$true] %s41
      %44 = dma.hbm_to_vmem [thread:$0]  %s1, 128, %s42, [#allocation6]
    $region9: #{tpu_custom_call.1} parent=1 // pred_fallthru
      _
    // Predicated region
    $region10: #{tpu_custom_call.1} parent=1 // pred_check
      _
    $region11: #{tpu_custom_call.1} parent=1 // pred_check_branch
      %46 = sbr.rel (0) target = $region13
    $region12: #{tpu_custom_call.1} parent=1 // pred_region
      %s48 = ssub.s32 1024, 1024
      %49 = vsyncadd [#allocation6], %s48
      %s50 = sshll.u32 [#allocation7], 4
      %s51 = int_to_ptr.vmem [resolvable:$true] %s50
      %56 = dma.hbm_to_vmem [thread:$0]  %s2, 1024, %s51, [#allocation6], 128, 128, 8
    $region13: #{tpu_custom_call.1} parent=1 // pred_fallthru
      _
    // Predicated region
    $region14: #{tpu_custom_call.1} parent=1 // pred_check
      _
    $region15: #{tpu_custom_call.1} parent=1 // pred_check_branch
      %58 = sbr.rel (0) target = $region17
    $region16: #{tpu_custom_call.1} parent=1 // pred_region
      %s60 = ssub.s32 1152, 1152
      %61 = vsyncadd [#allocation9], %s60
      %s62 = sshll.u32 [#allocation8], 4
      %s63 = int_to_ptr.vmem [resolvable:$true] %s62
      %68 = dma.hbm_to_vmem [thread:$0]  %s3, 1152, %s63, [#allocation9], 192, 192, 12
    $region17: #{tpu_custom_call.1} parent=1 // pred_fallthru
      _
    // Predicated region
    $region18: #{tpu_custom_call.1} parent=1 // pred_check
      _
    $region19: #{tpu_custom_call.1} parent=1 // pred_check_branch
      %70 = sbr.rel (0) target = $region21
    $region20: #{tpu_custom_call.1} parent=1 // pred_region
      %s72 = ssub.s32 768, 768
      %73 = vsyncadd [#allocation9], %s72
      %s74 = sshll.u32 [#allocation10], 4
      %s75 = int_to_ptr.vmem [resolvable:$true] %s74
      %80 = dma.hbm_to_vmem [thread:$0]  %s4, 768, %s75, [#allocation9], 192, 192, 12
    $region21: #{tpu_custom_call.1} parent=1 // pred_fallthru
      _
    // Predicated region
    $region22: #{tpu_custom_call.1} parent=1 // pred_check
      _
    $region23: #{tpu_custom_call.1} parent=1 // pred_check_branch
      %82 = sbr.rel (0) target = $region25
    $region24: #{tpu_custom_call.1} parent=1 // pred_region
      _
    $region25: #{tpu_custom_call.1} parent=1 // pred_fallthru
      _
    // Predicated region
    $region26: #{tpu_custom_call.1} parent=1 // pred_check
      _
    $region27: #{tpu_custom_call.1} parent=1 // pred_check_branch
      %84 = sbr.rel (0) target = $region29
    $region28: #{tpu_custom_call.1} parent=1 // pred_region
      _
    $region29: #{tpu_custom_call.1} parent=1 // pred_fallthru
      _
    // Predicated region
    $region30: #{tpu_custom_call.1} parent=1 // pred_check
      _
    $region31: #{tpu_custom_call.1} parent=1 // pred_check_branch
      %86 = sbr.rel (0) target = $region33
    $region32: #{tpu_custom_call.1} parent=1 // pred_region
      %s88 = ssub.s32 512, 512
      %89 = vsyncadd [#allocation12], %s88
      %s90 = sshll.u32 [#allocation11], 4
      %s91 = int_to_ptr.vmem [resolvable:$true] %s90
      %96 = dma.hbm_to_vmem [thread:$0]  %s7, 512, %s91, [#allocation12], 64, 64, 4
    $region33: #{tpu_custom_call.1} parent=1 // pred_fallthru
      _
    // Predicated region
    $region34: #{tpu_custom_call.1} parent=1 // pred_check
      _
    $region35: #{tpu_custom_call.1} parent=1 // pred_check_branch
      %98 = sbr.rel (0) target = $region37
    $region36: #{tpu_custom_call.1} parent=1 // pred_region
      _
    $region37: #{tpu_custom_call.1} parent=1 // pred_fallthru
      _
    // Predicated region
    $region38: #{tpu_custom_call.1} parent=1 // pred_check
      _
    $region39: #{tpu_custom_call.1} parent=1 // pred_check_branch
      %100 = sbr.rel (0) target = $region41
    $region40: #{tpu_custom_call.1} parent=1 // pred_region
      %101 = dma.done [#allocation3], 64
    $region41: #{tpu_custom_call.1} parent=1 // pred_fallthru
      _
    // Predicated region
    $region42: #{tpu_custom_call.1} parent=1 // pred_check
      _
    $region43: #{tpu_custom_call.1} parent=1 // pred_check_branch
      %103 = sbr.rel (0) target = $region45
    $region44: #{tpu_custom_call.1} parent=1 // pred_region
      %104 = dma.done [#allocation6], 128
    $region45: #{tpu_custom_call.1} parent=1 // pred_fallthru
      _
    // Predicated region
    $region46: #{tpu_custom_call.1} parent=1 // pred_check
      _
    $region47: #{tpu_custom_call.1} parent=1 // pred_check_branch
      %106 = sbr.rel (0) target = $region49
    $region48: #{tpu_custom_call.1} parent=1 // pred_region
      %107 = dma.done [#allocation6], 1024
    $region49: #{tpu_custom_call.1} parent=1 // pred_fallthru
      _
    // Predicated region
    $region50: #{tpu_custom_call.1} parent=1 // pred_check
      _
    $region51: #{tpu_custom_call.1} parent=1 // pred_check_branch
      %109 = sbr.rel (0) target = $region53
    $region52: #{tpu_custom_call.1} parent=1 // pred_region
      %110 = dma.done [#allocation9], 1152
    $region53: #{tpu_custom_call.1} parent=1 // pred_fallthru
      _
    // Predicated region
    $region54: #{tpu_custom_call.1} parent=1 // pred_check
      _
    $region55: #{tpu_custom_call.1} parent=1 // pred_check_branch
      %112 = sbr.rel (0) target = $region57
    $region56: #{tpu_custom_call.1} parent=1 // pred_region
      %113 = dma.done [#allocation9], 768
    $region57: #{tpu_custom_call.1} parent=1 // pred_fallthru
      _
    // Predicated region
    $region58: #{tpu_custom_call.1} parent=1 // pred_check
      _
    $region59: #{tpu_custom_call.1} parent=1 // pred_check_branch
      %115 = sbr.rel (0) target = $region61
    $region60: #{tpu_custom_call.1} parent=1 // pred_region
      %116 = dma.done [#allocation12], 512
    $region61: #{tpu_custom_call.1} parent=1 // pred_fallthru
      _
    %v118 = vld [vmem:[#allocation2] sm:$0xf]
    %v119 = vld [vmem:[#allocation5] sm:$0xff]
    %v120 = vld [vmem:[#allocation7] sm:$0xff]
    %v121 = vld [vmem:[#allocation7 + $0x8] sm:$0xff]
    %v122 = vld [vmem:[#allocation7 + $0x10] sm:$0xff]
    %v123 = vld [vmem:[#allocation7 + $0x18] sm:$0xff]
    %v124 = vld [vmem:[#allocation7 + $0x20] sm:$0xff]
    %v125 = vld [vmem:[#allocation7 + $0x28] sm:$0xff]
    %v126 = vld [vmem:[#allocation7 + $0x30] sm:$0xff]
    %v127 = vld [vmem:[#allocation7 + $0x38] sm:$0xff]
    %v128 = vld [vmem:[#allocation8] sm:$0xff]
    %v129 = vld [vmem:[#allocation8 + $0x8] sm:$0xf]
    %v130 = vld [vmem:[#allocation8 + $0xc] sm:$0xff]
    %v131 = vld [vmem:[#allocation8 + $0x14] sm:$0xf]
    %v132 = vld [vmem:[#allocation8 + $0x18] sm:$0xff]
    %v133 = vld [vmem:[#allocation8 + $0x20] sm:$0xf]
    %v134 = vld [vmem:[#allocation8 + $0x24] sm:$0xff]
    %v135 = vld [vmem:[#allocation8 + $0x2c] sm:$0xf]
    %v136 = vld [vmem:[#allocation8 + $0x30] sm:$0xff]
    %v137 = vld [vmem:[#allocation8 + $0x38] sm:$0xf]
    %v138 = vld [vmem:[#allocation8 + $0x3c] sm:$0xff]
    %v139 = vld [vmem:[#allocation8 + $0x44] sm:$0xf]
    %v140 = vld [vmem:[%s5] sm:$0x7]
    %v142 = vlaneseq
    %v143 = vshrl.u32 %v142, 7
    %v144 = vsub.s32 0, %v143
    %v145 = vrot.slane %v140, %v144
    %v146 = vlaneseq
    %v147 = vshrl.u32 %v146, 7
    %v148 = vsub.s32 1, %v147
    %v149 = vrot.slane %v140, %v148
    %v150 = vlaneseq
    %v151 = vshrl.u32 %v150, 7
    %v152 = vsub.s32 2, %v151
    %v153 = vrot.slane %v140, %v152
    %v169 = vunpack.c.l.b16 %v128
    %v170 = vunpack.c.h.b16 %v128
    %v171 = vunpack.c.l.b16 %v129
    %v172 = vunpack.c.l.b16 %v130
    %v173 = vunpack.c.h.b16 %v130
    %v174 = vunpack.c.l.b16 %v131
    %v175 = vunpack.c.l.b16 %v132
    %v176 = vunpack.c.h.b16 %v132
    %v177 = vunpack.c.l.b16 %v133
    %v178 = vunpack.c.l.b16 %v134
    %v179 = vunpack.c.h.b16 %v134
    %v180 = vunpack.c.l.b16 %v135
    %v181 = vunpack.c.l.b16 %v136
    %v182 = vunpack.c.h.b16 %v136
    %v183 = vunpack.c.l.b16 %v137
    %v184 = vunpack.c.l.b16 %v138
    %v185 = vunpack.c.h.b16 %v138
    %v186 = vunpack.c.l.b16 %v139
    %v187 = vpack.c.b16 %v172, %v169
    %v188 = vpack.c.b16 %v173, %v170
    %v189 = vpack.c.b16 %v174, %v171
    %v190 = vpack.c.b16 %v178, %v175
    %v191 = vpack.c.b16 %v179, %v176
    %v192 = vpack.c.b16 %v180, %v177
    %v193 = vpack.c.b16 %v184, %v181
    %v194 = vpack.c.b16 %v185, %v182
    %v195 = vpack.c.b16 %v186, %v183
    %vm205 = vcmask 392192
    %v207 = vsel %vm205, %v118, 0
    %209 = vmatprep.subr.bf16.mxu0 %v188
    %210 = vmatpush1.bf16.msra.mxu0 %v187
    %211 = vmatprep.subr.bf16.mxu0 %v191
    %212 = vmatpush1.bf16.msra.mxu0 %v190
    %213 = vmatprep.subr.bf16.mxu0 %v194
    %214 = vmatpush1.bf16.msra.mxu0 %v193
    %215 = vmatprep.subr.bf16.mxu0 0
    %216 = vmatpush1.bf16.msra.mxu0 0
    %217 = vmatprep.subr.bf16.mxu0 0
    %218 = vmatpush1.bf16.msra.mxu0 0
    %219 = vmatprep.subr.bf16.mxu0 0
    %220 = vmatpush1.bf16.msra.mxu0 0
    %221 = vmatprep.subr.bf16.mxu0 0
    %222 = vmatpush1.bf16.msra.mxu0 0
    %223 = vmatprep.subr.bf16.mxu0 0
    %224 = vmatpush1.bf16.msra.mxu0 0
    %225 = vmatprep.subr.bf16.mxu0 0
    %226 = vmatpush1.bf16.msra.mxu0 0
    %227 = vmatprep.subr.bf16.mxu0 0
    %228 = vmatpush1.bf16.msra.mxu0 0
    %229 = vmatprep.subr.bf16.mxu0 0
    %230 = vmatpush1.bf16.msra.mxu0 0
    %231 = vmatprep.subr.bf16.mxu0 0
    %232 = vmatpush1.bf16.msra.mxu0 0
    %233 = vmatprep.subr.bf16.mxu0 0
    %234 = vmatpush1.bf16.msra.mxu0 0
    %235 = vmatprep.subr.bf16.mxu0 0
    %236 = vmatpush1.bf16.msra.mxu0 0
    %237 = vmatprep.subr.bf16.mxu0 0
    %238 = vmatpush1.bf16.msra.mxu0 0
    %239 = vmatprep.subr.bf16.mxu0 0
    %240 = vmatpush1.bf16.msra.mxu0 0
    %241 = vmatprep.mubr.bf16.mxu0 0
    %242 = vmatmul.mubr.bf16.gmra.mrb[0].mxu0 %v207
    %v243 = vpop.f32.mrb[0].mxu0
    %v244 = vadd.f32 %v145, %v243
    %v245 = vpop.f32.mrb[0].mxu0
    %v246 = vadd.f32 %v149, %v245
    %v247 = vpop.f32.mrb[0].mxu0
    %v248 = vpop.f32.mrb[0].mxu0
    %249 = vdwg.mxu0
    %250 = vmatprep.subr.bf16.mxu0 0
    %251 = vmatpush1.bf16.msra.mxu0 %v189
    %252 = vmatprep.subr.bf16.mxu0 0
    %253 = vmatpush1.bf16.msra.mxu0 %v192
    %254 = vmatprep.subr.bf16.mxu0 0
    %255 = vmatpush1.bf16.msra.mxu0 %v195
    %256 = vmatprep.subr.bf16.mxu0 0
    %257 = vmatpush1.bf16.msra.mxu0 0
    %258 = vmatprep.subr.bf16.mxu0 0
    %259 = vmatpush1.bf16.msra.mxu0 0
    %260 = vmatprep.subr.bf16.mxu0 0
    %261 = vmatpush1.bf16.msra.mxu0 0
    %262 = vmatprep.subr.bf16.mxu0 0
    %263 = vmatpush1.bf16.msra.mxu0 0
    %264 = vmatprep.subr.bf16.mxu0 0
    %265 = vmatpush1.bf16.msra.mxu0 0
    %266 = vmatprep.subr.bf16.mxu0 0
    %267 = vmatpush1.bf16.msra.mxu0 0
    %268 = vmatprep.subr.bf16.mxu0 0
    %269 = vmatpush1.bf16.msra.mxu0 0
    %270 = vmatprep.subr.bf16.mxu0 0
    %271 = vmatpush1.bf16.msra.mxu0 0
    %272 = vmatprep.subr.bf16.mxu0 0
    %273 = vmatpush1.bf16.msra.mxu0 0
    %274 = vmatprep.subr.bf16.mxu0 0
    %275 = vmatpush1.bf16.msra.mxu0 0
    %276 = vmatprep.subr.bf16.mxu0 0
    %277 = vmatpush1.bf16.msra.mxu0 0
    %278 = vmatprep.subr.bf16.mxu0 0
    %279 = vmatpush1.bf16.msra.mxu0 0
    %280 = vmatprep.subr.bf16.mxu0 0
    %281 = vmatpush1.bf16.msra.mxu0 0
    %282 = vmatprep.mubr.bf16.mxu0 0
    %283 = vmatmul.mubr.bf16.gmra.mrb[0].mxu0 %v207
    %v284 = vpop.f32.mrb[0].mxu0
    %v285 = vadd.f32 %v153, %v284
    %v286 = vpop.f32.mrb[0].mxu0
    %v287 = vpop.f32.mrb[0].mxu0
    %v288 = vpop.f32.mrb[0].mxu0
    %289 = vdwg.mxu0
    %v290 = vpack.c.bf16 %v119, %v119
    %v291 = vld [vmem:[#allocation10] sm:$0xff]
    %v292 = vld [vmem:[#allocation10 + $0x8] sm:$0xf]
    %v293 = vld [vmem:[#allocation10 + $0xc] sm:$0xff]
    %v294 = vld [vmem:[#allocation10 + $0x14] sm:$0xf]
    %v295 = vld [vmem:[#allocation10 + $0x18] sm:$0xff]
    %v296 = vld [vmem:[#allocation10 + $0x20] sm:$0xf]
    %v297 = vld [vmem:[#allocation10 + $0x24] sm:$0xff]
    %v298 = vld [vmem:[#allocation10 + $0x2c] sm:$0xf]
    %v307 = vunpack.c.l.b16 %v291
    %v308 = vunpack.c.h.b16 %v291
    %v309 = vunpack.c.l.b16 %v292
    %v310 = vunpack.c.l.b16 %v293
    %v311 = vunpack.c.h.b16 %v293
    %v312 = vunpack.c.l.b16 %v294
    %v313 = vunpack.c.l.b16 %v295
    %v314 = vunpack.c.h.b16 %v295
    %v315 = vunpack.c.l.b16 %v296
    %v316 = vunpack.c.l.b16 %v297
    %v317 = vunpack.c.h.b16 %v297
    %v318 = vunpack.c.l.b16 %v298
    %v319 = vpack.c.b16 %v310, %v307
    %v320 = vpack.c.b16 %v311, %v308
    %v321 = vpack.c.b16 %v312, %v309
    %v322 = vpack.c.b16 %v316, %v313
    %v323 = vpack.c.b16 %v317, %v314
    %v324 = vpack.c.b16 %v318, %v315
    %vm331 = vcmask 261120
    %v333 = vsel %vm331, %v290, 0
    %335 = vmatprep.subr.bf16.mxu0 %v320
    %336 = vmatpush1.bf16.msra.mxu0 %v319
    %337 = vmatprep.subr.bf16.mxu0 %v323
    %338 = vmatpush1.bf16.msra.mxu0 %v322
    %339 = vmatprep.subr.bf16.mxu0 0
    %340 = vmatpush1.bf16.msra.mxu0 0
    %341 = vmatprep.subr.bf16.mxu0 0
    %342 = vmatpush1.bf16.msra.mxu0 0
    %343 = vmatprep.subr.bf16.mxu0 0
    %344 = vmatpush1.bf16.msra.mxu0 0
    %345 = vmatprep.subr.bf16.mxu0 0
    %346 = vmatpush1.bf16.msra.mxu0 0
    %347 = vmatprep.subr.bf16.mxu0 0
    %348 = vmatpush1.bf16.msra.mxu0 0
    %349 = vmatprep.subr.bf16.mxu0 0
    %350 = vmatpush1.bf16.msra.mxu0 0
    %351 = vmatprep.subr.bf16.mxu0 0
    %352 = vmatpush1.bf16.msra.mxu0 0
    %353 = vmatprep.subr.bf16.mxu0 0
    %354 = vmatpush1.bf16.msra.mxu0 0
    %355 = vmatprep.subr.bf16.mxu0 0
    %356 = vmatpush1.bf16.msra.mxu0 0
    %357 = vmatprep.subr.bf16.mxu0 0
    %358 = vmatpush1.bf16.msra.mxu0 0
    %359 = vmatprep.subr.bf16.mxu0 0
    %360 = vmatpush1.bf16.msra.mxu0 0
    %361 = vmatprep.subr.bf16.mxu0 0
    %362 = vmatpush1.bf16.msra.mxu0 0
    %363 = vmatprep.subr.bf16.mxu0 0
    %364 = vmatpush1.bf16.msra.mxu0 0
    %365 = vmatprep.subr.bf16.mxu0 0
    %366 = vmatpush1.bf16.msra.mxu0 0
    %367 = vmatprep.mubr.bf16.mxu0 0
    %368 = vmatmul.mubr.bf16.gmra.mrb[0].mxu0 %v333
    %v369 = vpop.f32.mrb[0].mxu0
    %v370 = vadd.f32 0.0, %v369
    %v371 = vpop.f32.mrb[0].mxu0
    %v372 = vadd.f32 0.0, %v371
    %v373 = vpop.f32.mrb[0].mxu0
    %v374 = vpop.f32.mrb[0].mxu0
    %375 = vdwg.mxu0
    %376 = vmatprep.subr.bf16.mxu0 0
    %377 = vmatpush1.bf16.msra.mxu0 %v321
    %378 = vmatprep.subr.bf16.mxu0 0
    %379 = vmatpush1.bf16.msra.mxu0 %v324
    %380 = vmatprep.subr.bf16.mxu0 0
    %381 = vmatpush1.bf16.msra.mxu0 0
    %382 = vmatprep.subr.bf16.mxu0 0
    %383 = vmatpush1.bf16.msra.mxu0 0
    %384 = vmatprep.subr.bf16.mxu0 0
    %385 = vmatpush1.bf16.msra.mxu0 0
    %386 = vmatprep.subr.bf16.mxu0 0
    %387 = vmatpush1.bf16.msra.mxu0 0
    %388 = vmatprep.subr.bf16.mxu0 0
    %389 = vmatpush1.bf16.msra.mxu0 0
    %390 = vmatprep.subr.bf16.mxu0 0
    %391 = vmatpush1.bf16.msra.mxu0 0
    %392 = vmatprep.subr.bf16.mxu0 0
    %393 = vmatpush1.bf16.msra.mxu0 0
    %394 = vmatprep.subr.bf16.mxu0 0
    %395 = vmatpush1.bf16.msra.mxu0 0
    %396 = vmatprep.subr.bf16.mxu0 0
    %397 = vmatpush1.bf16.msra.mxu0 0
    %398 = vmatprep.subr.bf16.mxu0 0
    %399 = vmatpush1.bf16.msra.mxu0 0
    %400 = vmatprep.subr.bf16.mxu0 0
    %401 = vmatpush1.bf16.msra.mxu0 0
    %402 = vmatprep.subr.bf16.mxu0 0
    %403 = vmatpush1.bf16.msra.mxu0 0
    %404 = vmatprep.subr.bf16.mxu0 0
    %405 = vmatpush1.bf16.msra.mxu0 0
    %406 = vmatprep.subr.bf16.mxu0 0
    %407 = vmatpush1.bf16.msra.mxu0 0
    %408 = vmatprep.mubr.bf16.mxu0 0
    %409 = vmatmul.mubr.bf16.gmra.mrb[0].mxu0 %v333
    %v410 = vpop.f32.mrb[0].mxu0
    %v411 = vadd.f32 0.0, %v410
    %v412 = vpop.f32.mrb[0].mxu0
    %v413 = vpop.f32.mrb[0].mxu0
    %v414 = vpop.f32.mrb[0].mxu0
    %415 = vdwg.mxu0
    %v416 = vadd.f32 %v244, %v370
    %v417 = vxor.u32 %v416, 2147483648
    %v418 = vmul.f32 %v417, 1.442695
    %v419 = vpow.pop %v418
    %v420 = vadd.f32 %v419, 1.0
    %v421 = vrcp.pop %v420
    %v422 = vmul.f32 1.0, %v421
    %v423 = vadd.f32 %v246, %v372
    %v424 = vxor.u32 %v423, 2147483648
    %v425 = vmul.f32 %v424, 1.442695
    %v426 = vpow.pop %v425
    %v427 = vadd.f32 %v426, 1.0
    %v428 = vrcp.pop %v427
    %v429 = vmul.f32 1.0, %v428
    %v430 = vld [vmem:[%s6] sm:$0x1]
    %v432 = vlaneseq
    %v433 = vshrl.u32 %v432, 7
    %v434 = vsub.s32 0, %v433
    %v435 = vrot.slane %v430, %v434
    %v437 = vadd.f32 %v411, %v435
    %v438 = vmul.f32 %v422, %v437
    %v439 = vadd.f32 %v285, %v438
    %v440 = vtanh.pop %v439
    %v441 = vsub.f32 1.0, %v429
    %v442 = vmul.f32 %v441, %v440
    %v443 = vmul.f32 %v429, %v119
    %v444 = vadd.f32 %v442, %v443
    %v446 = vcombine.high %v444, %v444
    %v448 = vunpack.c.l.s4 1966171168
    %v449 = vunpack.c.0.s8 %v448
    %v450 = vlaneseq
    %v451 = vshrl.u32 %v450, 7
    %v452 = vsub.s32 %v449, %v451
    %v453 = vrot.slane %v444, %v452
    %v455 = vunpack.c.l.s4 1966171168
    %v456 = vunpack.c.0.s8 %v455
    %v457 = vlaneseq
    %v458 = vshrl.u32 %v457, 7
    %v459 = vsub.s32 %v456, %v458
    %v460 = vrot.slane %v446, %v459
    %v461 = vcombine.high %v453, %v453
    %v462 = vcombine.high %v460, %v460
    %v464 = vunpack.c.l.s4 1966171168
    %v465 = vunpack.c.0.s8 %v464
    %v466 = vlaneseq
    %v467 = vshrl.u32 %v466, 7
    %v468 = vsub.s32 %v465, %v467
    %v469 = vrot.slane %v453, %v468
    %v471 = vunpack.c.l.s4 1966171168
    %v472 = vunpack.c.0.s8 %v471
    %v473 = vlaneseq
    %v474 = vshrl.u32 %v473, 7
    %v475 = vsub.s32 %v472, %v474
    %v476 = vrot.slane %v460, %v475
    %v478 = vunpack.c.l.s4 1966171168
    %v479 = vunpack.c.0.s8 %v478
    %v480 = vlaneseq
    %v481 = vshrl.u32 %v480, 7
    %v482 = vsub.s32 %v479, %v481
    %v483 = vrot.slane %v461, %v482
    %v485 = vunpack.c.l.s4 1966171168
    %v486 = vunpack.c.0.s8 %v485
    %v487 = vlaneseq
    %v488 = vshrl.u32 %v487, 7
    %v489 = vsub.s32 %v486, %v488
    %v490 = vrot.slane %v462, %v489
    %v491 = vcombine.high %v469, %v469
    %v492 = vcombine.high %v476, %v476
    %v493 = vcombine.high %v483, %v483
    %v494 = vcombine.high %v490, %v490
    %v495 = vlaneseq
    %v496 = vshrl.u32 %v495, 7
    %v497 = vsub.s32 0, %v496
    %v498 = vrot.slane %v469, %v497
    %v499 = vlaneseq
    %v500 = vshrl.u32 %v499, 7
    %v501 = vsub.s32 0, %v500
    %v502 = vrot.slane %v483, %v501
    %v503 = vlaneseq
    %v504 = vshrl.u32 %v503, 7
    %v505 = vsub.s32 0, %v504
    %v506 = vrot.slane %v491, %v505
    %v507 = vlaneseq
    %v508 = vshrl.u32 %v507, 7
    %v509 = vsub.s32 0, %v508
    %v510 = vrot.slane %v493, %v509
    %v511 = vlaneseq
    %v512 = vshrl.u32 %v511, 7
    %v513 = vsub.s32 0, %v512
    %v514 = vrot.slane %v476, %v513
    %v515 = vlaneseq
    %v516 = vshrl.u32 %v515, 7
    %v517 = vsub.s32 0, %v516
    %v518 = vrot.slane %v490, %v517
    %v519 = vlaneseq
    %v520 = vshrl.u32 %v519, 7
    %v521 = vsub.s32 0, %v520
    %v522 = vrot.slane %v492, %v521
    %v523 = vlaneseq
    %v524 = vshrl.u32 %v523, 7
    %v525 = vsub.s32 0, %v524
    %v526 = vrot.slane %v494, %v525
    %v535 = vmul.f32 %v498, %v120
    %v536 = vmul.f32 %v502, %v121
    %v537 = vmul.f32 %v506, %v122
    %v538 = vmul.f32 %v510, %v123
    %v539 = vmul.f32 %v514, %v124
    %v540 = vmul.f32 %v518, %v125
    %v541 = vmul.f32 %v522, %v126
    %v542 = vmul.f32 %v526, %v127
    %v543 = vsel %vm331, %v535, 0.0
    %544 = vadd.xlane.f32.xlu0 %v543
    %v545 = vpop.xlane.xlu0 %544
    %v546 = vsel %vm331, %v536, 0.0
    %547 = vadd.xlane.f32.xlu0 %v546
    %v548 = vpop.xlane.xlu0 %547
    %v549 = vsel %vm331, %v537, 0.0
    %550 = vadd.xlane.f32.xlu0 %v549
    %v551 = vpop.xlane.xlu0 %550
    %v552 = vsel %vm331, %v538, 0.0
    %553 = vadd.xlane.f32.xlu0 %v552
    %v554 = vpop.xlane.xlu0 %553
    %v555 = vsel %vm331, %v539, 0.0
    %556 = vadd.xlane.f32.xlu0 %v555
    %v557 = vpop.xlane.xlu0 %556
    %v558 = vsel %vm331, %v540, 0.0
    %559 = vadd.xlane.f32.xlu0 %v558
    %v560 = vpop.xlane.xlu0 %559
    %v561 = vsel %vm331, %v541, 0.0
    %562 = vadd.xlane.f32.xlu0 %v561
    %v563 = vpop.xlane.xlu0 %562
    %v564 = vsel %vm331, %v542, 0.0
    %565 = vadd.xlane.f32.xlu0 %v564
    %v566 = vpop.xlane.xlu0 %565
    %v575 = vlaneseq
    %v576 = vand.u32 %v575, 127
    %v577 = vlaneseq
    %v578 = vshrl.u32 %v577, 7
    %v579 = vsub.s32 %v576, %v578
    %v580 = vrot.slane %v545, %v579
    %v581 = vlaneseq
    %v582 = vshrl.u32 %v581, 7
    %v583 = vsub.s32 %v576, %v582
    %v584 = vrot.slane %v548, %v583
    %v585 = vlaneseq
    %v586 = vshrl.u32 %v585, 7
    %v587 = vsub.s32 %v576, %v586
    %v588 = vrot.slane %v551, %v587
    %v589 = vlaneseq
    %v590 = vshrl.u32 %v589, 7
    %v591 = vsub.s32 %v576, %v590
    %v592 = vrot.slane %v554, %v591
    %v593 = vlaneseq
    %v594 = vshrl.u32 %v593, 7
    %v595 = vsub.s32 %v576, %v594
    %v596 = vrot.slane %v557, %v595
    %v597 = vlaneseq
    %v598 = vshrl.u32 %v597, 7
    %v599 = vsub.s32 %v576, %v598
    %v600 = vrot.slane %v560, %v599
    %v601 = vlaneseq
    %v602 = vshrl.u32 %v601, 7
    %v603 = vsub.s32 %v576, %v602
    %v604 = vrot.slane %v563, %v603
    %v605 = vlaneseq
    %v606 = vshrl.u32 %v605, 7
    %v607 = vsub.s32 %v576, %v606
    %v608 = vrot.slane %v566, %v607
    %vm609 = vcmask 1041409
    %v610 = vsel %vm609, %v584, %v580
    %vm611 = vcmask 1042434
    %v612 = vsel %vm611, %v588, %v610
    %vm613 = vcmask 1043459
    %v614 = vsel %vm613, %v592, %v612
    %vm615 = vcmask 1044484
    %v616 = vsel %vm615, %v596, %v614
    %vm617 = vcmask 1045509
    %v618 = vsel %vm617, %v600, %v616
    %vm619 = vcmask 1046534
    %v620 = vsel %vm619, %v604, %v618
    %vm621 = vcmask 1047559
    %v622 = vsel %vm621, %v608, %v620
    %vm624 = vcmask 64512
    %v625 = vsel %vm624, %v622, -inf
    %626 = vmax.xlane.f32.xlu0 %v625
    %v627 = vpop.xlane.xlu0 %626
    %v629 = vlaneseq
    %v630 = vshrl.u32 %v629, 7
    %v631 = vsub.s32 0, %v630
    %v632 = vrot.slane %v627, %v631
    %v633 = vlaneseq
    %v634 = vshrl.u32 %v633, 7
    %v635 = vsub.s32 1, %v634
    %v636 = vrot.slane %v627, %v635
    %v637 = vlaneseq
    %v638 = vshrl.u32 %v637, 7
    %v639 = vsub.s32 2, %v638
    %v640 = vrot.slane %v627, %v639
    %v641 = vlaneseq
    %v642 = vshrl.u32 %v641, 7
    %v643 = vsub.s32 3, %v642
    %v644 = vrot.slane %v627, %v643
    %v645 = vlaneseq
    %v646 = vshrl.u32 %v645, 7
    %v647 = vsub.s32 4, %v646
    %v648 = vrot.slane %v627, %v647
    %v649 = vlaneseq
    %v650 = vshrl.u32 %v649, 7
    %v651 = vsub.s32 5, %v650
    %v652 = vrot.slane %v627, %v651
    %v653 = vlaneseq
    %v654 = vshrl.u32 %v653, 7
    %v655 = vsub.s32 6, %v654
    %v656 = vrot.slane %v627, %v655
    %v657 = vlaneseq
    %v658 = vshrl.u32 %v657, 7
    %v659 = vsub.s32 7, %v658
    %v660 = vrot.slane %v627, %v659
    %v669 = vsub.f32 %v545, %v632
    %v670 = vsub.f32 %v548, %v636
    %v671 = vsub.f32 %v551, %v640
    %v672 = vsub.f32 %v554, %v644
    %v673 = vsub.f32 %v557, %v648
    %v674 = vsub.f32 %v560, %v652
    %v675 = vsub.f32 %v563, %v656
    %v676 = vsub.f32 %v566, %v660
    %v677 = vmul.f32 %v669, 1.442695
    %v678 = vpow.pop %v677
    %v679 = vmul.f32 %v670, 1.442695
    %v680 = vpow.pop %v679
    %v681 = vmul.f32 %v671, 1.442695
    %v682 = vpow.pop %v681
    %v683 = vmul.f32 %v672, 1.442695
    %v684 = vpow.pop %v683
    %v685 = vmul.f32 %v673, 1.442695
    %v686 = vpow.pop %v685
    %v687 = vmul.f32 %v674, 1.442695
    %v688 = vpow.pop %v687
    %v689 = vmul.f32 %v675, 1.442695
    %v690 = vpow.pop %v689
    %v691 = vmul.f32 %v676, 1.442695
    %v692 = vpow.pop %v691
    %701 = vset.pattern.permute.xlu0 0
    %702 = vperm.xlu0 %701, %v678
    %v703 = vpop.permute.xlu0 %702
    %704 = vset.pattern.permute.xlu0 0
    %705 = vperm.xlu0 %704, %v680
    %v706 = vpop.permute.xlu0 %705
    %707 = vset.pattern.permute.xlu0 0
    %708 = vperm.xlu0 %707, %v682
    %v709 = vpop.permute.xlu0 %708
    %710 = vset.pattern.permute.xlu0 0
    %711 = vperm.xlu0 %710, %v684
    %v712 = vpop.permute.xlu0 %711
    %713 = vset.pattern.permute.xlu0 0
    %714 = vperm.xlu0 %713, %v686
    %v715 = vpop.permute.xlu0 %714
    %716 = vset.pattern.permute.xlu0 0
    %717 = vperm.xlu0 %716, %v688
    %v718 = vpop.permute.xlu0 %717
    %719 = vset.pattern.permute.xlu0 0
    %720 = vperm.xlu0 %719, %v690
    %v721 = vpop.permute.xlu0 %720
    %722 = vset.pattern.permute.xlu0 0
    %723 = vperm.xlu0 %722, %v692
    %v724 = vpop.permute.xlu0 %723
    %v725 = vlaneseq
    %v726 = vshrl.u32 %v725, 7
    %v727 = vsub.s32 %v576, %v726
    %v728 = vrot.slane %v703, %v727
    %v729 = vlaneseq
    %v730 = vshrl.u32 %v729, 7
    %v731 = vsub.s32 %v576, %v730
    %v732 = vrot.slane %v706, %v731
    %v733 = vlaneseq
    %v734 = vshrl.u32 %v733, 7
    %v735 = vsub.s32 %v576, %v734
    %v736 = vrot.slane %v709, %v735
    %v737 = vlaneseq
    %v738 = vshrl.u32 %v737, 7
    %v739 = vsub.s32 %v576, %v738
    %v740 = vrot.slane %v712, %v739
    %v741 = vlaneseq
    %v742 = vshrl.u32 %v741, 7
    %v743 = vsub.s32 %v576, %v742
    %v744 = vrot.slane %v715, %v743
    %v745 = vlaneseq
    %v746 = vshrl.u32 %v745, 7
    %v747 = vsub.s32 %v576, %v746
    %v748 = vrot.slane %v718, %v747
    %v749 = vlaneseq
    %v750 = vshrl.u32 %v749, 7
    %v751 = vsub.s32 %v576, %v750
    %v752 = vrot.slane %v721, %v751
    %v753 = vlaneseq
    %v754 = vshrl.u32 %v753, 7
    %v755 = vsub.s32 %v576, %v754
    %v756 = vrot.slane %v724, %v755
    %v757 = vsel %vm609, %v732, %v728
    %v758 = vsel %vm611, %v736, %v757
    %v759 = vsel %vm613, %v740, %v758
    %v760 = vsel %vm615, %v744, %v759
    %v761 = vsel %vm617, %v748, %v760
    %v762 = vsel %vm619, %v752, %v761
    %v763 = vsel %vm621, %v756, %v762
    %v765 = vsel %vm624, %v763, 0.0
    %766 = vadd.xlane.f32.xlu0 %v765
    %v767 = vpop.xlane.xlu0 %766
    %v768 = vrcp.pop %v767
    %v770 = vlaneseq
    %v771 = vshrl.u32 %v770, 7
    %v772 = vsub.s32 0, %v771
    %v773 = vrot.slane %v768, %v772
    %v774 = vlaneseq
    %v775 = vshrl.u32 %v774, 7
    %v776 = vsub.s32 1, %v775
    %v777 = vrot.slane %v768, %v776
    %v778 = vlaneseq
    %v779 = vshrl.u32 %v778, 7
    %v780 = vsub.s32 2, %v779
    %v781 = vrot.slane %v768, %v780
    %v782 = vlaneseq
    %v783 = vshrl.u32 %v782, 7
    %v784 = vsub.s32 3, %v783
    %v785 = vrot.slane %v768, %v784
    %v786 = vlaneseq
    %v787 = vshrl.u32 %v786, 7
    %v788 = vsub.s32 4, %v787
    %v789 = vrot.slane %v768, %v788
    %v790 = vlaneseq
    %v791 = vshrl.u32 %v790, 7
    %v792 = vsub.s32 5, %v791
    %v793 = vrot.slane %v768, %v792
    %v794 = vlaneseq
    %v795 = vshrl.u32 %v794, 7
    %v796 = vsub.s32 6, %v795
    %v797 = vrot.slane %v768, %v796
    %v798 = vlaneseq
    %v799 = vshrl.u32 %v798, 7
    %v800 = vsub.s32 7, %v799
    %v801 = vrot.slane %v768, %v800
    %v810 = vmul.f32 %v678, %v773
    %v811 = vmul.f32 %v680, %v777
    %v812 = vmul.f32 %v682, %v781
    %v813 = vmul.f32 %v684, %v785
    %v814 = vmul.f32 %v686, %v789
    %v815 = vmul.f32 %v688, %v793
    %v816 = vmul.f32 %v690, %v797
    %v817 = vmul.f32 %v692, %v801
    %819 = vset.pattern.permute.xlu0 0
    %820 = vperm.xlu0 %819, %v810
    %v821 = vpop.permute.xlu0 %820
    %824 = vset.pattern.permute.xlu0 0
    %825 = vperm.xlu0 %824, %v811
    %v826 = vpop.permute.xlu0 %825
    %829 = vset.pattern.permute.xlu0 0
    %830 = vperm.xlu0 %829, %v812
    %v831 = vpop.permute.xlu0 %830
    %834 = vset.pattern.permute.xlu0 0
    %835 = vperm.xlu0 %834, %v813
    %v836 = vpop.permute.xlu0 %835
    %839 = vset.pattern.permute.xlu0 0
    %840 = vperm.xlu0 %839, %v814
    %v841 = vpop.permute.xlu0 %840
    %844 = vset.pattern.permute.xlu0 0
    %845 = vperm.xlu0 %844, %v815
    %v846 = vpop.permute.xlu0 %845
    %849 = vset.pattern.permute.xlu0 0
    %850 = vperm.xlu0 %849, %v816
    %v851 = vpop.permute.xlu0 %850
    %854 = vset.pattern.permute.xlu0 0
    %855 = vperm.xlu0 %854, %v817
    %v856 = vpop.permute.xlu0 %855
    %v858 = vmul.f32 %v821, %v120
    %v859 = vmul.f32 %v826, %v121
    %v860 = vmul.f32 %v831, %v122
    %v861 = vmul.f32 %v836, %v123
    %v862 = vmul.f32 %v841, %v124
    %v863 = vmul.f32 %v846, %v125
    %v864 = vmul.f32 %v851, %v126
    %v865 = vmul.f32 %v856, %v127
    %v866 = vsel %vm331, %v858, 0.0
    %v867 = vrot.slane %v866, 4
    %v868 = vadd.f32 %v866, %v867
    %v869 = vrot.slane %v868, 2
    %v870 = vadd.f32 %v868, %v869
    %v871 = vrot.slane %v870, 1
    %v872 = vadd.f32 %v870, %v871
    %v873 = vsel %vm331, %v859, 0.0
    %v874 = vrot.slane %v873, 4
    %v875 = vadd.f32 %v873, %v874
    %v876 = vrot.slane %v875, 2
    %v877 = vadd.f32 %v875, %v876
    %v878 = vrot.slane %v877, 1
    %v879 = vadd.f32 %v877, %v878
    %v880 = vsel %vm331, %v860, 0.0
    %v881 = vrot.slane %v880, 4
    %v882 = vadd.f32 %v880, %v881
    %v883 = vrot.slane %v882, 2
    %v884 = vadd.f32 %v882, %v883
    %v885 = vrot.slane %v884, 1
    %v886 = vadd.f32 %v884, %v885
    %v887 = vsel %vm331, %v861, 0.0
    %v888 = vrot.slane %v887, 4
    %v889 = vadd.f32 %v887, %v888
    %v890 = vrot.slane %v889, 2
    %v891 = vadd.f32 %v889, %v890
    %v892 = vrot.slane %v891, 1
    %v893 = vadd.f32 %v891, %v892
    %v894 = vsel %vm331, %v862, 0.0
    %v895 = vrot.slane %v894, 4
    %v896 = vadd.f32 %v894, %v895
    %v897 = vrot.slane %v896, 2
    %v898 = vadd.f32 %v896, %v897
    %v899 = vrot.slane %v898, 1
    %v900 = vadd.f32 %v898, %v899
    %v901 = vsel %vm331, %v863, 0.0
    %v902 = vrot.slane %v901, 4
    %v903 = vadd.f32 %v901, %v902
    %v904 = vrot.slane %v903, 2
    %v905 = vadd.f32 %v903, %v904
    %v906 = vrot.slane %v905, 1
    %v907 = vadd.f32 %v905, %v906
    %v908 = vsel %vm331, %v864, 0.0
    %v909 = vrot.slane %v908, 4
    %v910 = vadd.f32 %v908, %v909
    %v911 = vrot.slane %v910, 2
    %v912 = vadd.f32 %v910, %v911
    %v913 = vrot.slane %v912, 1
    %v914 = vadd.f32 %v912, %v913
    %v915 = vsel %vm331, %v865, 0.0
    %v916 = vrot.slane %v915, 4
    %v917 = vadd.f32 %v915, %v916
    %v918 = vrot.slane %v917, 2
    %v919 = vadd.f32 %v917, %v918
    %v920 = vrot.slane %v919, 1
    %v921 = vadd.f32 %v919, %v920
    %v930 = vsel %vm609, %v879, %v872
    %v931 = vsel %vm611, %v886, %v930
    %v932 = vsel %vm613, %v893, %v931
    %v933 = vsel %vm615, %v900, %v932
    %v934 = vsel %vm617, %v907, %v933
    %v935 = vsel %vm619, %v914, %v934
    %v936 = vsel %vm621, %v921, %v935
    %937 = vrot.lane.b32.xlu0 %v936, 32
    %v938 = vpop.permute.xlu0 %937
    %v940 = vsel %vm331, %v444, %v938
    %v941 = vpack.c.bf16 %v940, %v940
    %v942 = vld [vmem:[#allocation11] sm:$0xf]
    %v943 = vld [vmem:[#allocation11 + $0x4] sm:$0xf]
    %v944 = vld [vmem:[#allocation11 + $0x8] sm:$0xf]
    %v945 = vld [vmem:[#allocation11 + $0xc] sm:$0xf]
    %v946 = vld [vmem:[#allocation11 + $0x10] sm:$0xf]
    %v947 = vld [vmem:[#allocation11 + $0x14] sm:$0xf]
    %v948 = vld [vmem:[#allocation11 + $0x18] sm:$0xf]
    %v949 = vld [vmem:[#allocation11 + $0x1c] sm:$0xf]
    %v950 = vld [vmem:[%s8] sm:$0x1]
    %v952 = vlaneseq
    %v953 = vshrl.u32 %v952, 7
    %v954 = vsub.s32 0, %v953
    %v955 = vrot.slane %v950, %v954
    %v965 = vunpack.c.l.b16 %v942
    %v966 = vunpack.c.l.b16 %v943
    %v967 = vunpack.c.l.b16 %v944
    %v968 = vunpack.c.l.b16 %v945
    %v969 = vunpack.c.l.b16 %v946
    %v970 = vunpack.c.l.b16 %v947
    %v971 = vunpack.c.l.b16 %v948
    %v972 = vunpack.c.l.b16 %v949
    %v973 = vpack.c.b16 %v966, %v965
    %v974 = vpack.c.b16 %v968, %v967
    %v975 = vpack.c.b16 %v970, %v969
    %v976 = vpack.c.b16 %v972, %v971
    %vm981 = vcmask 523264
    %v983 = vsel %vm981, %v941, 0
    %985 = vmatprep.subr.bf16.mxu0 0
    %986 = vmatpush1.bf16.msra.mxu0 %v973
    %987 = vmatprep.subr.bf16.mxu0 0
    %988 = vmatpush1.bf16.msra.mxu0 %v974
    %989 = vmatprep.subr.bf16.mxu0 0
    %990 = vmatpush1.bf16.msra.mxu0 %v975
    %991 = vmatprep.subr.bf16.mxu0 0
    %992 = vmatpush1.bf16.msra.mxu0 %v976
    %993 = vmatprep.subr.bf16.mxu0 0
    %994 = vmatpush1.bf16.msra.mxu0 0
    %995 = vmatprep.subr.bf16.mxu0 0
    %996 = vmatpush1.bf16.msra.mxu0 0
    %997 = vmatprep.subr.bf16.mxu0 0
    %998 = vmatpush1.bf16.msra.mxu0 0
    %999 = vmatprep.subr.bf16.mxu0 0
    %1000 = vmatpush1.bf16.msra.mxu0 0
    %1001 = vmatprep.subr.bf16.mxu0 0
    %1002 = vmatpush1.bf16.msra.mxu0 0
    %1003 = vmatprep.subr.bf16.mxu0 0
    %1004 = vmatpush1.bf16.msra.mxu0 0
    %1005 = vmatprep.subr.bf16.mxu0 0
    %1006 = vmatpush1.bf16.msra.mxu0 0
    %1007 = vmatprep.subr.bf16.mxu0 0
    %1008 = vmatpush1.bf16.msra.mxu0 0
    %1009 = vmatprep.subr.bf16.mxu0 0
    %1010 = vmatpush1.bf16.msra.mxu0 0
    %1011 = vmatprep.subr.bf16.mxu0 0
    %1012 = vmatpush1.bf16.msra.mxu0 0
    %1013 = vmatprep.subr.bf16.mxu0 0
    %1014 = vmatpush1.bf16.msra.mxu0 0
    %1015 = vmatprep.subr.bf16.mxu0 0
    %1016 = vmatpush1.bf16.msra.mxu0 0
    %1017 = vmatprep.mubr.bf16.mxu0 0
    %1018 = vmatmul.mubr.bf16.gmra.mrb[0].mxu0 %v983
    %v1019 = vpop.f32.mrb[0].mxu0
    %v1020 = vadd.f32 %v955, %v1019
    %v1021 = vpop.f32.mrb[0].mxu0
    %v1022 = vpop.f32.mrb[0].mxu0
    %v1023 = vpop.f32.mrb[0].mxu0
    %1024 = vdwg.mxu0
    %vm1025 = vcmp.lt.s32.totalorder %v576, 32
    %v1026 = vsel %vm1025, %v1020, -1e+30
    %1027 = vmax.xlane.f32.xlu0 %v1026
    %v1028 = vpop.xlane.xlu0 %1027
    %v1029 = vsub.f32 %v1026, %v1028
    %v1030 = vmul.f32 %v1029, 1.442695
    %v1031 = vpow.pop %v1030
    %1032 = vadd.xlane.f32.xlu0 %v1031
    %v1033 = vpop.xlane.xlu0 %1032
    %v1034 = vlog2.pop %v1033
    %v1035 = vmul.f32 %v1034, 0.6931472
    %v1036 = vadd.f32 %v1035, %v1028
    %v1037 = vsub.f32 %v1026, %v1036
    %1038 = vst [vmem:[#allocation13] sm:$0xff] %v1037
    %1040 = vst.msk [vmem:[#allocation14] sm:$0xff] %vm331, %v936
    %1041 = vst.msk [vmem:[#allocation16] sm:$0xff] %vm331, %v444
    %v1042 = vlaneseq
    %v1043 = vshrl.u32 %v1042, 7
    %v1044 = vsub.s32 %v576, %v1043
    %v1045 = vrot.slane %v821, %v1044
    %v1046 = vlaneseq
    %v1047 = vshrl.u32 %v1046, 7
    %v1048 = vsub.s32 %v576, %v1047
    %v1049 = vrot.slane %v826, %v1048
    %v1050 = vlaneseq
    %v1051 = vshrl.u32 %v1050, 7
    %v1052 = vsub.s32 %v576, %v1051
    %v1053 = vrot.slane %v831, %v1052
    %v1054 = vlaneseq
    %v1055 = vshrl.u32 %v1054, 7
    %v1056 = vsub.s32 %v576, %v1055
    %v1057 = vrot.slane %v836, %v1056
    %v1058 = vlaneseq
    %v1059 = vshrl.u32 %v1058, 7
    %v1060 = vsub.s32 %v576, %v1059
    %v1061 = vrot.slane %v841, %v1060
    %v1062 = vlaneseq
    %v1063 = vshrl.u32 %v1062, 7
    %v1064 = vsub.s32 %v576, %v1063
    %v1065 = vrot.slane %v846, %v1064
    %v1066 = vlaneseq
    %v1067 = vshrl.u32 %v1066, 7
    %v1068 = vsub.s32 %v576, %v1067
    %v1069 = vrot.slane %v851, %v1068
    %v1070 = vlaneseq
    %v1071 = vshrl.u32 %v1070, 7
    %v1072 = vsub.s32 %v576, %v1071
    %v1073 = vrot.slane %v856, %v1072
    %v1074 = vsel %vm609, %v1049, %v1045
    %v1075 = vsel %vm611, %v1053, %v1074
    %v1076 = vsel %vm613, %v1057, %v1075
    %v1077 = vsel %vm615, %v1061, %v1076
    %v1078 = vsel %vm617, %v1065, %v1077
    %v1079 = vsel %vm619, %v1069, %v1078
    %v1080 = vsel %vm621, %v1073, %v1079
    %1082 = vst.msk [vmem:[#allocation17] sm:$0xff] %vm624, %v1080
    // Predicated region
    $region62: #{tpu_custom_call.1} parent=1 // pred_check
      _
    $region63: #{tpu_custom_call.1} parent=1 // pred_check_branch
      %1084 = sbr.rel (0) target = $region65
    $region64: #{tpu_custom_call.1} parent=1 // pred_region
      %s1086 = ssub.s32 128, 128
      %1087 = vsyncadd [#allocation4], %s1086
      %s1089 = sshll.u32 [#allocation13], 4
      %s1090 = int_to_ptr.vmem [resolvable:$true] %s1089
      %1092 = dma.vmem_to_hbm [thread:$0]  %s1090, 128, %s9, [#allocation4]
    $region65: #{tpu_custom_call.1} parent=1 // pred_fallthru
      _
    // Predicated region
    $region66: #{tpu_custom_call.1} parent=1 // pred_check
      _
    $region67: #{tpu_custom_call.1} parent=1 // pred_check_branch
      %1094 = sbr.rel (0) target = $region69
    $region68: #{tpu_custom_call.1} parent=1 // pred_region
      %s1096 = ssub.s32 128, 128
      %1097 = vsyncadd [#allocation15], %s1096
      %s1099 = sshll.u32 [#allocation14], 4
      %s1100 = int_to_ptr.vmem [resolvable:$true] %s1099
      %1102 = dma.vmem_to_hbm [thread:$0]  %s1100, 128, %s10, [#allocation15]
    $region69: #{tpu_custom_call.1} parent=1 // pred_fallthru
      _
    // Predicated region
    $region70: #{tpu_custom_call.1} parent=1 // pred_check
      _
    $region71: #{tpu_custom_call.1} parent=1 // pred_check_branch
      %1104 = sbr.rel (0) target = $region73
    $region72: #{tpu_custom_call.1} parent=1 // pred_region
      %s1106 = ssub.s32 128, 128
      %1107 = vsyncadd [#allocation15], %s1106
      %s1109 = sshll.u32 [#allocation16], 4
      %s1110 = int_to_ptr.vmem [resolvable:$true] %s1109
      %1112 = dma.vmem_to_hbm [thread:$0]  %s1110, 128, %s11, [#allocation15]
    $region73: #{tpu_custom_call.1} parent=1 // pred_fallthru
      _
    // Predicated region
    $region74: #{tpu_custom_call.1} parent=1 // pred_check
      _
    $region75: #{tpu_custom_call.1} parent=1 // pred_check_branch
      %1114 = sbr.rel (0) target = $region77
    $region76: #{tpu_custom_call.1} parent=1 // pred_region
      %s1116 = ssub.s32 128, 128
      %1117 = vsyncadd [#allocation18], %s1116
      %s1119 = sshll.u32 [#allocation17], 4
      %s1120 = int_to_ptr.vmem [resolvable:$true] %s1119
      %1122 = dma.vmem_to_hbm [thread:$0]  %s1120, 128, %s12, [#allocation18]
    $region77: #{tpu_custom_call.1} parent=1 // pred_fallthru
      _
    // Predicated region
    $region78: #{tpu_custom_call.1} parent=1 // pred_check
      _
    $region79: #{tpu_custom_call.1} parent=1 // pred_check_branch
      %1124 = sbr.rel (0) target = $region81
    $region80: #{tpu_custom_call.1} parent=1 // pred_region
      %1125 = dma.done [#allocation4], 128
    $region81: #{tpu_custom_call.1} parent=1 // pred_fallthru
      _
    // Predicated region
    $region82: #{tpu_custom_call.1} parent=1 // pred_check
      _
    $region83: #{tpu_custom_call.1} parent=1 // pred_check_branch
      %1127 = sbr.rel (0) target = $region85
    $region84: #{tpu_custom_call.1} parent=1 // pred_region
      %1128 = dma.done [#allocation15], 128
    $region85: #{tpu_custom_call.1} parent=1 // pred_fallthru
      _
    // Predicated region
    $region86: #{tpu_custom_call.1} parent=1 // pred_check
      _
    $region87: #{tpu_custom_call.1} parent=1 // pred_check_branch
      %1130 = sbr.rel (0) target = $region89
    $region88: #{tpu_custom_call.1} parent=1 // pred_region
      %1131 = dma.done [#allocation15], 128
    $region89: #{tpu_custom_call.1} parent=1 // pred_fallthru
      _
    // Predicated region
    $region90: #{tpu_custom_call.1} parent=1 // pred_check
      _
    $region91: #{tpu_custom_call.1} parent=1 // pred_check_branch
      %1133 = sbr.rel (0) target = $region93
    $region92: #{tpu_custom_call.1} parent=1 // pred_region
      %1134 = dma.done [#allocation18], 128
    $region93: #{tpu_custom_call.1} parent=1 // pred_fallthru
      _
    %1135 = vsyncpa [#allocation3], 1
    %1136 = vsyncpa [#allocation6], 1
    %1137 = vsyncpa [#allocation9], 1
    %1138 = vsyncpa [#allocation12], 1
    %1139 = vsyncpa [#allocation4], 1
    %1140 = vsyncpa [#allocation15], 1
    %1141 = vsyncpa [#allocation18], 1

</llo_original>
